<compile_context>
chip_gen: v7x
topology: tpu7x:2x2x1
jax: 0.10.0
libtpu: 0.0.40
codegen_flags: <defaults>
</compile_context>

<pallas_src>
import functools
from typing import List

import jax
import jax.numpy as jnp
from jax.experimental import pallas as pl
from jax.experimental.pallas import tpu as pltpu


def _fused_mlp_kernel(*refs, n_layers: int):
    """refs = (x_ref, W1_ref, b1_ref, ..., Wn_ref, bn_ref, o_ref)."""
    x_ref = refs[0]
    o_ref = refs[-1]
    h = x_ref[...]
    for i in range(n_layers):
        w_ref = refs[1 + 2 * i]
        b_ref = refs[2 + 2 * i]
        # MXU matmul; cast activations to the weight dtype (no-op for f32,
        # native bf16 path if weights are bf16), accumulate in f32.
        h = jnp.dot(h.astype(w_ref.dtype), w_ref[...],
                    preferred_element_type=jnp.float32)
        h = h + b_ref[...].astype(jnp.float32)  # b_ref is [1, out]; broadcasts
        if i < n_layers - 1:
            h = jnp.maximum(h, 0.0)  # ReLU on all but the last layer
    # Final output last-dim (e.g. 32) < 128 lanes -> masked stores; negligible
    # at these shapes (weight DMA dominates).  Revisit only if profiling shows
    # store-slot saturation at large M.
    o_ref[...] = h.astype(o_ref.dtype)


def fused_mlp_pallas(x: jax.Array, params, *, tm: int = 512) -> jax.Array:
    """Fused MLP: x [M, K0] -> [M, N_last] in a single pallas_call.

    params: list of (W_T [in, out], b [out]) pairs.  Weights stay fully
    resident in VMEM (constant index_map + single-buffered); only the batch
    (M) axis is tiled/pipelined.  For best HBM efficiency at large M, pass x
    already in the weight dtype (e.g. bf16) from the producer — do NOT add a
    standalone cast in the wrapper (that is a separate HBM round trip).
    """
    M, K0 = x.shape
    n_layers = len(params)
    assert n_layers >= 1
    assert params[0][0].shape[0] == K0
    n_last = params[-1][0].shape[1]

    # ---- batch (M) tiling -------------------------------------------------
    if M <= tm:
        # Single block: block M == full M satisfies the (8,128) rule via the
        # full-dim exception (works for M=2).
        bm = M
    else:
        # Keep grid_m even so the "parallel" M axis splits across v7x's two
        # TensorCores (near-2x for batched inference); bm sublane-aligned.
        grid_m = pl.cdiv(M, tm)
        if grid_m % 2:
            grid_m += 1
        bm = -(-M // grid_m)            # ceil(M / grid_m)
        bm = max(8, ((bm + 7) // 8) * 8)
    grid_m = pl.cdiv(M, bm)

    # ---- VMEM / cost bookkeeping -------------------------------------------
    weight_bytes = sum(w.size * w.dtype.itemsize + b.size * b.dtype.itemsize
                       for (w, b) in params)
    w_dtype = params[0][0].dtype
    x_tile_bytes = bm * K0 * x.dtype.itemsize
    out_tile_bytes = bm * n_last * x.dtype.itemsize
    # In-kernel temporaries: cast copy of the x tile (if dtypes differ) plus
    # f32 intermediate activations for every layer output.
    tmp_bytes = 0 if w_dtype == x.dtype else bm * K0 * jnp.dtype(w_dtype).itemsize
    tmp_bytes += sum(bm * w.shape[1] * 4 for (w, _) in params)
    est_vmem = (weight_bytes            # Buffered(1): weights counted once
                + 2 * x_tile_bytes      # double-buffered x tile
                + 2 * out_tile_bytes    # double-buffered output tile
                + tmp_bytes)

    try:
        phys_vmem = int(pltpu.get_tpu_info().vmem_capacity_bytes)
    except Exception:
        phys_vmem = 64 * 1024 * 1024    # v7x has the smallest per-TC VMEM
    vmem_budget = int(phys_vmem * 0.9)
    assert est_vmem <= vmem_budget, (
        "Weights too large to keep fully resident in VMEM on this TPU "
        f"generation (estimated {est_vmem} B > budget {vmem_budget} B); "
        "tile the N dimension or shrink the batch tile.")
    vmem_limit = int(min(vmem_budget, max(est_vmem + (8 << 20), 16 << 20)))

    flops = 2 * M * sum(w.shape[0] * w.shape[1] for (w, _) in params)
    bytes_accessed = (weight_bytes
                      + M * K0 * x.dtype.itemsize
                      + M * n_last * x.dtype.itemsize)
    cost = pl.CostEstimate(flops=flops, transcendentals=0,
                           bytes_accessed=bytes_accessed)

    # ---- specs --------------------------------------------------------------
    resident = pl.Buffered(1)  # constant index_map -> DMA once, single buffer
    in_specs = [pl.BlockSpec((bm, K0), lambda i: (i, 0))]
    flat_args = [x]
    for (w_t, b) in params:
        k_i, n_i = w_t.shape
        in_specs.append(pl.BlockSpec((k_i, n_i), lambda i: (0, 0),
                                     pipeline_mode=resident))
        in_specs.append(pl.BlockSpec((1, n_i), lambda i: (0, 0),
                                     pipeline_mode=resident))
        flat_args.append(w_t)
        flat_args.append(b.reshape(1, n_i))

    kernel = functools.partial(_fused_mlp_kernel, n_layers=n_layers)

    return pl.pallas_call(
        kernel,
        out_shape=jax.ShapeDtypeStruct((M, n_last), x.dtype),
        grid=(grid_m,),
        in_specs=in_specs,
        out_specs=pl.BlockSpec((bm, n_last), lambda i: (i, 0)),
        compiler_params=pltpu.CompilerParams(
            dimension_semantics=("parallel",),
            vmem_limit_bytes=vmem_limit),
        cost_estimate=cost,
    )(*flat_args)


def init_small_dense_encoder_params(widths: List[int], key: jax.Array,
                                    weight_dtype=jnp.bfloat16):
    """Deterministic params. Mimics nn.Linear's U(-1/sqrt(in), 1/sqrt(in)) init.

    Returns a list of (W_T [in, out], b [out]) pairs, one per Linear layer.
    Default bf16 halves weight-DMA bytes (the dominant HBM traffic for this
    kernel at small batch); pass weight_dtype=jnp.float32 to match PyTorch
    numerics exactly.
    """
    params = []
    for i in range(len(widths) - 1):
        fan_in, fan_out = widths[i], widths[i + 1]
        key, kw, kb = jax.random.split(key, 3)
        bound = 1.0 / jnp.sqrt(jnp.float32(fan_in))
        w_t = jax.random.uniform(kw, (fan_in, fan_out), jnp.float32,
                                 minval=-bound, maxval=bound)
        b = jax.random.uniform(kb, (fan_out,), jnp.float32,
                               minval=-bound, maxval=bound)
        params.append((w_t.astype(weight_dtype), b.astype(weight_dtype)))
    return params


@jax.jit
def small_dense_encoder_forward(x: jax.Array, params) -> jax.Array:
    """Flatten (NCHW -> [B, C*H*W]) then the fused Linear/ReLU stack."""
    B = x.shape[0]
    h = x.reshape(B, -1)  # torch.nn.Flatten() equivalent (glue, plain JAX)
    return fused_mlp_pallas(h, params)


def _reference_forward(x: jax.Array, params) -> jax.Array:
    B = x.shape[0]
    h = x.reshape(B, -1)
    n_layers = len(params)
    for i, (w_t, b) in enumerate(params):
        h = h @ w_t.astype(jnp.float32) + b.astype(jnp.float32)
        if i < n_layers - 1:
            h = jnp.maximum(h, 0.0)
    return h


if __name__ == "__main__":
    key = jax.random.PRNGKey(0)
    k_x, k_p = jax.random.split(key)

    # Input consistent with an NCHW image: [B=2, C=4, H=16, W=16] -> 1024 features.
    x = jax.random.normal(k_x, (2, 4, 16, 16), jnp.float32)
    widths = [4 * 16 * 16, 256, 128, 32]

    # 1) f32 weights: exact numerics parity with the PyTorch module.
    params_f32 = init_small_dense_encoder_params(widths, k_p,
                                                 weight_dtype=jnp.float32)
    out_f32 = jax.block_until_ready(small_dense_encoder_forward(x, params_f32))
    ref = _reference_forward(x, params_f32)
    assert out_f32.shape == (2, widths[-1]), out_f32.shape
    assert jnp.allclose(out_f32, ref, atol=1e-4, rtol=1e-4), \
        float(jnp.max(jnp.abs(out_f32 - ref)))

    # 2) bf16 weights: deployed (weight-DMA-optimized) path; loose tolerance.
    params_bf16 = init_small_dense_encoder_params(widths, k_p,
                                                  weight_dtype=jnp.bfloat16)
    out_bf16 = jax.block_until_ready(small_dense_encoder_forward(x, params_bf16))
    assert out_bf16.shape == (2, widths[-1]), out_bf16.shape
    assert jnp.allclose(out_bf16, ref, atol=5e-2, rtol=5e-2), \
        float(jnp.max(jnp.abs(out_bf16 - ref)))

    print("KERNEL_OK")
</pallas_src>

<mosaic_0001>
module attributes {stable_mosaic.version = 11 : i64} {
  func.func @_fused_mlp_kernel(%arg0: i32, %arg1: memref<2x1024xf32, #tpu.memory_space<vmem>>, %arg2: memref<1024x256xf32, #tpu.memory_space<vmem>>, %arg3: memref<1x256xf32, #tpu.memory_space<vmem>>, %arg4: memref<256x128xf32, #tpu.memory_space<vmem>>, %arg5: memref<1x128xf32, #tpu.memory_space<vmem>>, %arg6: memref<128x32xf32, #tpu.memory_space<vmem>>, %arg7: memref<1x32xf32, #tpu.memory_space<vmem>>, %arg8: memref<2x32xf32, #tpu.memory_space<vmem>>) attributes {dimension_semantics = [#tpu.dimension_semantics<parallel>], iteration_bounds = array<i64: 1>, scalar_prefetch = 0 : i64, scratch_operands = 0 : i64, tpu.core_type = #tpu.core_type<tc>, window_params = [{transform_indices = @transform_0, window_bounds = array<i64: 2, 1024>}, {pipeline_mode = #tpu.pipeline_mode<synchronous>, transform_indices = @transform_1, window_bounds = array<i64: 1024, 256>}, {pipeline_mode = #tpu.pipeline_mode<synchronous>, transform_indices = @transform_2, window_bounds = array<i64: 1, 256>}, {pipeline_mode = #tpu.pipeline_mode<synchronous>, transform_indices = @transform_3, window_bounds = array<i64: 256, 128>}, {pipeline_mode = #tpu.pipeline_mode<synchronous>, transform_indices = @transform_4, window_bounds = array<i64: 1, 128>}, {pipeline_mode = #tpu.pipeline_mode<synchronous>, transform_indices = @transform_5, window_bounds = array<i64: 128, 32>}, {pipeline_mode = #tpu.pipeline_mode<synchronous>, transform_indices = @transform_6, window_bounds = array<i64: 1, 32>}, {transform_indices = @transform_7, window_bounds = array<i64: 2, 32>}]} {
    %c0 = arith.constant 0 : index
    %c0_0 = arith.constant 0 : index
    %0 = vector.load %arg1[%c0, %c0_0] : memref<2x1024xf32, #tpu.memory_space<vmem>>, vector<2x1024xf32>
    %c0_1 = arith.constant 0 : index
    %c0_2 = arith.constant 0 : index
    %1 = vector.load %arg2[%c0_1, %c0_2] : memref<1024x256xf32, #tpu.memory_space<vmem>>, vector<1024x256xf32>
    %cst = arith.constant dense<0.000000e+00> : vector<2x256xf32>
    %2 = tpu.matmul %0, %1, %cst {dimension_numbers = #tpu.dot_dimension_numbers<[1], [0], [0], [1], [0, 0, 1, 1], [], []>} : vector<2x1024xf32>, vector<1024x256xf32>, vector<2x256xf32> -> vector<2x256xf32>
    %c0_3 = arith.constant 0 : index
    %c0_4 = arith.constant 0 : index
    %3 = vector.load %arg3[%c0_3, %c0_4] : memref<1x256xf32, #tpu.memory_space<vmem>>, vector<1x256xf32>
    %4 = vector.broadcast %3 : vector<1x256xf32> to vector<2x256xf32>
    %5 = arith.addf %2, %4 : vector<2x256xf32>
    %cst_5 = arith.constant 0.000000e+00 : f32
    %6 = vector.broadcast %cst_5 : f32 to vector<2x256xf32>
    %7 = arith.maximumf %5, %6 : vector<2x256xf32>
    %c0_6 = arith.constant 0 : index
    %c0_7 = arith.constant 0 : index
    %8 = vector.load %arg4[%c0_6, %c0_7] : memref<256x128xf32, #tpu.memory_space<vmem>>, vector<256x128xf32>
    %cst_8 = arith.constant dense<0.000000e+00> : vector<2x128xf32>
    %9 = tpu.matmul %7, %8, %cst_8 {dimension_numbers = #tpu.dot_dimension_numbers<[1], [0], [0], [1], [0, 0, 1, 1], [], []>} : vector<2x256xf32>, vector<256x128xf32>, vector<2x128xf32> -> vector<2x128xf32>
    %c0_9 = arith.constant 0 : index
    %c0_10 = arith.constant 0 : index
    %10 = vector.load %arg5[%c0_9, %c0_10] : memref<1x128xf32, #tpu.memory_space<vmem>>, vector<1x128xf32>
    %11 = vector.broadcast %10 : vector<1x128xf32> to vector<2x128xf32>
    %12 = arith.addf %9, %11 : vector<2x128xf32>
    %cst_11 = arith.constant 0.000000e+00 : f32
    %13 = vector.broadcast %cst_11 : f32 to vector<2x128xf32>
    %14 = arith.maximumf %12, %13 : vector<2x128xf32>
    %c0_12 = arith.constant 0 : index
    %c0_13 = arith.constant 0 : index
    %15 = vector.load %arg6[%c0_12, %c0_13] : memref<128x32xf32, #tpu.memory_space<vmem>>, vector<128x32xf32>
    %cst_14 = arith.constant dense<0.000000e+00> : vector<2x32xf32>
    %16 = tpu.matmul %14, %15, %cst_14 {dimension_numbers = #tpu.dot_dimension_numbers<[1], [0], [0], [1], [0, 0, 1, 1], [], []>} : vector<2x128xf32>, vector<128x32xf32>, vector<2x32xf32> -> vector<2x32xf32>
    %c0_15 = arith.constant 0 : index
    %c0_16 = arith.constant 0 : index
    %17 = vector.load %arg7[%c0_15, %c0_16] : memref<1x32xf32, #tpu.memory_space<vmem>>, vector<1x32xf32>
    %18 = vector.broadcast %17 : vector<1x32xf32> to vector<2x32xf32>
    %19 = arith.addf %16, %18 : vector<2x32xf32>
    %c0_17 = arith.constant 0 : index
    %c0_18 = arith.constant 0 : index
    %20 = vector.load %arg8[%c0_17, %c0_18] : memref<2x32xf32, #tpu.memory_space<vmem>>, vector<2x32xf32>
    tpu.vector_store %arg8[%c0_17, %c0_18], %19 {strides = array<i32>} : memref<2x32xf32, #tpu.memory_space<vmem>>, vector<2x32xf32>,
    return
  }
  func.func @transform_0(%arg0: i32) -> (i32, i32) {
    %c0_i32 = arith.constant 0 : i32
    %c0_i32_0 = arith.constant 0 : i32
    return %arg0, %c0_i32 : i32, i32
  }
  func.func @transform_1(%arg0: i32) -> (i32, i32) {
    %c0_i32 = arith.constant 0 : i32
    %c0_i32_0 = arith.constant 0 : i32
    %c0_i32_1 = arith.constant 0 : i32
    return %c0_i32, %c0_i32_0 : i32, i32
  }
  func.func @transform_2(%arg0: i32) -> (i32, i32) {
    %c0_i32 = arith.constant 0 : i32
    %c0_i32_0 = arith.constant 0 : i32
    %c0_i32_1 = arith.constant 0 : i32
    return %c0_i32, %c0_i32_0 : i32, i32
  }
  func.func @transform_3(%arg0: i32) -> (i32, i32) {
    %c0_i32 = arith.constant 0 : i32
    %c0_i32_0 = arith.constant 0 : i32
    %c0_i32_1 = arith.constant 0 : i32
    return %c0_i32, %c0_i32_0 : i32, i32
  }
  func.func @transform_4(%arg0: i32) -> (i32, i32) {
    %c0_i32 = arith.constant 0 : i32
    %c0_i32_0 = arith.constant 0 : i32
    %c0_i32_1 = arith.constant 0 : i32
    return %c0_i32, %c0_i32_0 : i32, i32
  }
  func.func @transform_5(%arg0: i32) -> (i32, i32) {
    %c0_i32 = arith.constant 0 : i32
    %c0_i32_0 = arith.constant 0 : i32
    %c0_i32_1 = arith.constant 0 : i32
    return %c0_i32, %c0_i32_0 : i32, i32
  }
  func.func @transform_6(%arg0: i32) -> (i32, i32) {
    %c0_i32 = arith.constant 0 : i32
    %c0_i32_0 = arith.constant 0 : i32
    %c0_i32_1 = arith.constant 0 : i32
    return %c0_i32, %c0_i32_0 : i32, i32
  }
  func.func @transform_7(%arg0: i32) -> (i32, i32) {
    %c0_i32 = arith.constant 0 : i32
    %c0_i32_0 = arith.constant 0 : i32
    return %arg0, %c0_i32 : i32, i32
  }
}

</mosaic_0001>

<llo_original>
// kernel: small_dense_encoder_forward.1
$region0: #{small_dense_encoder_forward.1}
  #allocation0 [shape = 'u32[]', space=smem, size = 0x4, offset = 0x4, fixed_abs, tag = 'smem constant byte address 0x4 - core index']
  #allocation1 [shape = 'u32[144,128]{1,0:T(1,128)}', space=vmem, size = 0x12000, scoped, tag = 'internal scratch']
  %s0 = inlined_call_operand.vmem [shape: f32[2,1024], index: 0, kind: input, shape index: {}]
  %s1 = inlined_call_operand.hbm [shape: f32[1024,256], index: 1, kind: input, shape index: {}]
  %s2 = inlined_call_operand.vmem [shape: f32[1,256], index: 2, kind: input, shape index: {}]
  %s3 = inlined_call_operand.vmem [shape: f32[256,128], index: 3, kind: input, shape index: {}]
  %s4 = inlined_call_operand.vmem [shape: f32[1,128], index: 4, kind: input, shape index: {}]
  %s5 = inlined_call_operand.vmem [shape: f32[128,32], index: 5, kind: input, shape index: {}]
  %s6 = inlined_call_operand.vmem [shape: f32[1,32], index: 6, kind: input, shape index: {}]
  %s7 = inlined_call_operand.hbm [shape: f32[2,32], index: 7, kind: output, shape index: {}]
  %s8 = sld [smem:[#allocation0]]
  $region42: #{small_dense_encoder_forward.1} parent=0
    _
  %s10 = ssub.s32 1, %s8
  %s11 = scalar_select 0, %s10, %s8
  $region1: #{small_dense_encoder_forward.1} parent=0
    #allocation2 [shape = 'u8[1048576]{0}', space=vmem, size = 0x100000, scoped, tag = 'input window, operand 1, single buffered']
    #allocation3 [shape = 's32[1]{0}', space=sflag, size = 0x4, scoped, tag = 'scoped memory for small_dense_encoder_forward.1']
    #allocation4 [shape = 's32[1]{0}', space=sflag, size = 0x4, scoped, tag = 'scoped memory for small_dense_encoder_forward.1']
    #allocation5 [shape = 'u8[1024]{0}', space=vmem, size = 0x400, scoped, tag = 'output window, operand 0, single buffered']
    %12 = vsyncpa [#allocation3], 0
    %13 = vsyncpa [#allocation4], 0
    // Predicated region
    $region2: #{small_dense_encoder_forward.1} parent=1 // pred_check
      _
    $region3: #{small_dense_encoder_forward.1} parent=1 // pred_check_branch
      %15 = sbr.rel (0) target = $region5
    $region4: #{small_dense_encoder_forward.1} parent=1 // pred_region
      _
    $region5: #{small_dense_encoder_forward.1} parent=1 // pred_fallthru
      _
    // Predicated region
    $region6: #{small_dense_encoder_forward.1} parent=1 // pred_check
      _
    $region7: #{small_dense_encoder_forward.1} parent=1 // pred_check_branch
      %17 = sbr.rel (0) target = $region9
    $region8: #{small_dense_encoder_forward.1} parent=1 // pred_region
      %s19 = ssub.s32 32768, 32768
      %20 = vsyncadd [#allocation3], %s19
      %s21 = sshll.u32 [#allocation2], 4
      %s22 = int_to_ptr.vmem [resolvable:$true] %s21
      %27 = dma.hbm_to_vmem [thread:$0]  %s1, 32768, %s22, [#allocation3], 256, 256, 16
    $region9: #{small_dense_encoder_forward.1} parent=1 // pred_fallthru
      _
    // Predicated region
    $region10: #{small_dense_encoder_forward.1} parent=1 // pred_check
      _
    $region11: #{small_dense_encoder_forward.1} parent=1 // pred_check_branch
      %29 = sbr.rel (0) target = $region13
    $region12: #{small_dense_encoder_forward.1} parent=1 // pred_region
      _
    $region13: #{small_dense_encoder_forward.1} parent=1 // pred_fallthru
      _
    // Predicated region
    $region14: #{small_dense_encoder_forward.1} parent=1 // pred_check
      _
    $region15: #{small_dense_encoder_forward.1} parent=1 // pred_check_branch
      %31 = sbr.rel (0) target = $region17
    $region16: #{small_dense_encoder_forward.1} parent=1 // pred_region
      _
    $region17: #{small_dense_encoder_forward.1} parent=1 // pred_fallthru
      _
    // Predicated region
    $region18: #{small_dense_encoder_forward.1} parent=1 // pred_check
      _
    $region19: #{small_dense_encoder_forward.1} parent=1 // pred_check_branch
      %33 = sbr.rel (0) target = $region21
    $region20: #{small_dense_encoder_forward.1} parent=1 // pred_region
      _
    $region21: #{small_dense_encoder_forward.1} parent=1 // pred_fallthru
      _
    // Predicated region
    $region22: #{small_dense_encoder_forward.1} parent=1 // pred_check
      _
    $region23: #{small_dense_encoder_forward.1} parent=1 // pred_check_branch
      %35 = sbr.rel (0) target = $region25
    $region24: #{small_dense_encoder_forward.1} parent=1 // pred_region
      _
    $region25: #{small_dense_encoder_forward.1} parent=1 // pred_fallthru
      _
    // Predicated region
    $region26: #{small_dense_encoder_forward.1} parent=1 // pred_check
      _
    $region27: #{small_dense_encoder_forward.1} parent=1 // pred_check_branch
      %37 = sbr.rel (0) target = $region29
    $region28: #{small_dense_encoder_forward.1} parent=1 // pred_region
      _
    $region29: #{small_dense_encoder_forward.1} parent=1 // pred_fallthru
      _
    // Predicated region
    $region30: #{small_dense_encoder_forward.1} parent=1 // pred_check
      _
    $region31: #{small_dense_encoder_forward.1} parent=1 // pred_check_branch
      %39 = sbr.rel (0) target = $region33
    $region32: #{small_dense_encoder_forward.1} parent=1 // pred_region
      %40 = dma.done [#allocation3], 32768
    $region33: #{small_dense_encoder_forward.1} parent=1 // pred_fallthru
      _
    %v41 = vld [vmem:[%s0] sm:$0xff]
    %v42 = vld [vmem:[%s0 + $0x8] sm:$0xff]
    %v43 = vld [vmem:[#allocation2] sm:$0xff]
    %v44 = vld [vmem:[#allocation2 + $0x8] sm:$0xff]
    %v45 = vld [vmem:[#allocation2 + $0x10] sm:$0xff]
    %v46 = vld [vmem:[#allocation2 + $0x18] sm:$0xff]
    %v47 = vld [vmem:[#allocation2 + $0x20] sm:$0xff]
    %v48 = vld [vmem:[#allocation2 + $0x28] sm:$0xff]
    %v49 = vld [vmem:[#allocation2 + $0x30] sm:$0xff]
    %v50 = vld [vmem:[#allocation2 + $0x38] sm:$0xff]
    %v51 = vld [vmem:[#allocation2 + $0x40] sm:$0xff]
    %v52 = vld [vmem:[#allocation2 + $0x48] sm:$0xff]
    %v53 = vld [vmem:[#allocation2 + $0x50] sm:$0xff]
    %v54 = vld [vmem:[#allocation2 + $0x58] sm:$0xff]
    %v55 = vld [vmem:[#allocation2 + $0x60] sm:$0xff]
    %v56 = vld [vmem:[#allocation2 + $0x68] sm:$0xff]
    %v57 = vld [vmem:[#allocation2 + $0x70] sm:$0xff]
    %v58 = vld [vmem:[#allocation2 + $0x78] sm:$0xff]
    %v59 = vld [vmem:[#allocation2 + $0x80] sm:$0xff]
    %v60 = vld [vmem:[#allocation2 + $0x88] sm:$0xff]
    %v61 = vld [vmem:[#allocation2 + $0x90] sm:$0xff]
    %v62 = vld [vmem:[#allocation2 + $0x98] sm:$0xff]
    %v63 = vld [vmem:[#allocation2 + $0xa0] sm:$0xff]
    %v64 = vld [vmem:[#allocation2 + $0xa8] sm:$0xff]
    %v65 = vld [vmem:[#allocation2 + $0xb0] sm:$0xff]
    %v66 = vld [vmem:[#allocation2 + $0xb8] sm:$0xff]
    %v67 = vld [vmem:[#allocation2 + $0xc0] sm:$0xff]
    %v68 = vld [vmem:[#allocation2 + $0xc8] sm:$0xff]
    %v69 = vld [vmem:[#allocation2 + $0xd0] sm:$0xff]
    %v70 = vld [vmem:[#allocation2 + $0xd8] sm:$0xff]
    %v71 = vld [vmem:[#allocation2 + $0xe0] sm:$0xff]
    %v72 = vld [vmem:[#allocation2 + $0xe8] sm:$0xff]
    %v73 = vld [vmem:[#allocation2 + $0xf0] sm:$0xff]
    %v74 = vld [vmem:[#allocation2 + $0xf8] sm:$0xff]
    %v75 = vld [vmem:[#allocation2 + $0x100] sm:$0xff]
    %v76 = vld [vmem:[#allocation2 + $0x108] sm:$0xff]
    %v77 = vld [vmem:[#allocation2 + $0x110] sm:$0xff]
    %v78 = vld [vmem:[#allocation2 + $0x118] sm:$0xff]
    %v79 = vld [vmem:[#allocation2 + $0x120] sm:$0xff]
    %v80 = vld [vmem:[#allocation2 + $0x128] sm:$0xff]
    %v81 = vld [vmem:[#allocation2 + $0x130] sm:$0xff]
    %v82 = vld [vmem:[#allocation2 + $0x138] sm:$0xff]
    %v83 = vld [vmem:[#allocation2 + $0x140] sm:$0xff]
    %v84 = vld [vmem:[#allocation2 + $0x148] sm:$0xff]
    %v85 = vld [vmem:[#allocation2 + $0x150] sm:$0xff]
    %v86 = vld [vmem:[#allocation2 + $0x158] sm:$0xff]
    %v87 = vld [vmem:[#allocation2 + $0x160] sm:$0xff]
    %v88 = vld [vmem:[#allocation2 + $0x168] sm:$0xff]
    %v89 = vld [vmem:[#allocation2 + $0x170] sm:$0xff]
    %v90 = vld [vmem:[#allocation2 + $0x178] sm:$0xff]
    %v91 = vld [vmem:[#allocation2 + $0x180] sm:$0xff]
    %v92 = vld [vmem:[#allocation2 + $0x188] sm:$0xff]
    %v93 = vld [vmem:[#allocation2 + $0x190] sm:$0xff]
    %v94 = vld [vmem:[#allocation2 + $0x198] sm:$0xff]
    %v95 = vld [vmem:[#allocation2 + $0x1a0] sm:$0xff]
    %v96 = vld [vmem:[#allocation2 + $0x1a8] sm:$0xff]
    %v97 = vld [vmem:[#allocation2 + $0x1b0] sm:$0xff]
    %v98 = vld [vmem:[#allocation2 + $0x1b8] sm:$0xff]
    %v99 = vld [vmem:[#allocation2 + $0x1c0] sm:$0xff]
    %v100 = vld [vmem:[#allocation2 + $0x1c8] sm:$0xff]
    %v101 = vld [vmem:[#allocation2 + $0x1d0] sm:$0xff]
    %v102 = vld [vmem:[#allocation2 + $0x1d8] sm:$0xff]
    %v103 = vld [vmem:[#allocation2 + $0x1e0] sm:$0xff]
    %v104 = vld [vmem:[#allocation2 + $0x1e8] sm:$0xff]
    %v105 = vld [vmem:[#allocation2 + $0x1f0] sm:$0xff]
    %v106 = vld [vmem:[#allocation2 + $0x1f8] sm:$0xff]
    %v107 = vld [vmem:[#allocation2 + $0x200] sm:$0xff]
    %v108 = vld [vmem:[#allocation2 + $0x208] sm:$0xff]
    %v109 = vld [vmem:[#allocation2 + $0x210] sm:$0xff]
    %v110 = vld [vmem:[#allocation2 + $0x218] sm:$0xff]
    %v111 = vld [vmem:[#allocation2 + $0x220] sm:$0xff]
    %v112 = vld [vmem:[#allocation2 + $0x228] sm:$0xff]
    %v113 = vld [vmem:[#allocation2 + $0x230] sm:$0xff]
    %v114 = vld [vmem:[#allocation2 + $0x238] sm:$0xff]
    %v115 = vld [vmem:[#allocation2 + $0x240] sm:$0xff]
    %v116 = vld [vmem:[#allocation2 + $0x248] sm:$0xff]
    %v117 = vld [vmem:[#allocation2 + $0x250] sm:$0xff]
    %v118 = vld [vmem:[#allocation2 + $0x258] sm:$0xff]
    %v119 = vld [vmem:[#allocation2 + $0x260] sm:$0xff]
    %v120 = vld [vmem:[#allocation2 + $0x268] sm:$0xff]
    %v121 = vld [vmem:[#allocation2 + $0x270] sm:$0xff]
    %v122 = vld [vmem:[#allocation2 + $0x278] sm:$0xff]
    %v123 = vld [vmem:[#allocation2 + $0x280] sm:$0xff]
    %v124 = vld [vmem:[#allocation2 + $0x288] sm:$0xff]
    %v125 = vld [vmem:[#allocation2 + $0x290] sm:$0xff]
    %v126 = vld [vmem:[#allocation2 + $0x298] sm:$0xff]
    %v127 = vld [vmem:[#allocation2 + $0x2a0] sm:$0xff]
    %v128 = vld [vmem:[#allocation2 + $0x2a8] sm:$0xff]
    %v129 = vld [vmem:[#allocation2 + $0x2b0] sm:$0xff]
    %v130 = vld [vmem:[#allocation2 + $0x2b8] sm:$0xff]
    %v131 = vld [vmem:[#allocation2 + $0x2c0] sm:$0xff]
    %v132 = vld [vmem:[#allocation2 + $0x2c8] sm:$0xff]
    %v133 = vld [vmem:[#allocation2 + $0x2d0] sm:$0xff]
    %v134 = vld [vmem:[#allocation2 + $0x2d8] sm:$0xff]
    %v135 = vld [vmem:[#allocation2 + $0x2e0] sm:$0xff]
    %v136 = vld [vmem:[#allocation2 + $0x2e8] sm:$0xff]
    %v137 = vld [vmem:[#allocation2 + $0x2f0] sm:$0xff]
    %v138 = vld [vmem:[#allocation2 + $0x2f8] sm:$0xff]
    %v139 = vld [vmem:[#allocation2 + $0x300] sm:$0xff]
    %v140 = vld [vmem:[#allocation2 + $0x308] sm:$0xff]
    %v141 = vld [vmem:[#allocation2 + $0x310] sm:$0xff]
    %v142 = vld [vmem:[#allocation2 + $0x318] sm:$0xff]
    %v143 = vld [vmem:[#allocation2 + $0x320] sm:$0xff]
    %v144 = vld [vmem:[#allocation2 + $0x328] sm:$0xff]
    %v145 = vld [vmem:[#allocation2 + $0x330] sm:$0xff]
    %v146 = vld [vmem:[#allocation2 + $0x338] sm:$0xff]
    %v147 = vld [vmem:[#allocation2 + $0x340] sm:$0xff]
    %v148 = vld [vmem:[#allocation2 + $0x348] sm:$0xff]
    %v149 = vld [vmem:[#allocation2 + $0x350] sm:$0xff]
    %v150 = vld [vmem:[#allocation2 + $0x358] sm:$0xff]
    %v151 = vld [vmem:[#allocation2 + $0x360] sm:$0xff]
    %v152 = vld [vmem:[#allocation2 + $0x368] sm:$0xff]
    %v153 = vld [vmem:[#allocation2 + $0x370] sm:$0xff]
    %v154 = vld [vmem:[#allocation2 + $0x378] sm:$0xff]
    %v155 = vld [vmem:[#allocation2 + $0x380] sm:$0xff]
    %v156 = vld [vmem:[#allocation2 + $0x388] sm:$0xff]
    %v157 = vld [vmem:[#allocation2 + $0x390] sm:$0xff]
    %v158 = vld [vmem:[#allocation2 + $0x398] sm:$0xff]
    %v159 = vld [vmem:[#allocation2 + $0x3a0] sm:$0xff]
    %v160 = vld [vmem:[#allocation2 + $0x3a8] sm:$0xff]
    %v161 = vld [vmem:[#allocation2 + $0x3b0] sm:$0xff]
    %v162 = vld [vmem:[#allocation2 + $0x3b8] sm:$0xff]
    %v163 = vld [vmem:[#allocation2 + $0x3c0] sm:$0xff]
    %v164 = vld [vmem:[#allocation2 + $0x3c8] sm:$0xff]
    %v165 = vld [vmem:[#allocation2 + $0x3d0] sm:$0xff]
    %v166 = vld [vmem:[#allocation2 + $0x3d8] sm:$0xff]
    %v167 = vld [vmem:[#allocation2 + $0x3e0] sm:$0xff]
    %v168 = vld [vmem:[#allocation2 + $0x3e8] sm:$0xff]
    %v169 = vld [vmem:[#allocation2 + $0x3f0] sm:$0xff]
    %v170 = vld [vmem:[#allocation2 + $0x3f8] sm:$0xff]
    %v171 = vld [vmem:[#allocation2 + $0x400] sm:$0xff]
    %v172 = vld [vmem:[#allocation2 + $0x408] sm:$0xff]
    %v173 = vld [vmem:[#allocation2 + $0x410] sm:$0xff]
    %v174 = vld [vmem:[#allocation2 + $0x418] sm:$0xff]
    %v175 = vld [vmem:[#allocation2 + $0x420] sm:$0xff]
    %v176 = vld [vmem:[#allocation2 + $0x428] sm:$0xff]
    %v177 = vld [vmem:[#allocation2 + $0x430] sm:$0xff]
    %v178 = vld [vmem:[#allocation2 + $0x438] sm:$0xff]
    %v179 = vld [vmem:[#allocation2 + $0x440] sm:$0xff]
    %v180 = vld [vmem:[#allocation2 + $0x448] sm:$0xff]
    %v181 = vld [vmem:[#allocation2 + $0x450] sm:$0xff]
    %v182 = vld [vmem:[#allocation2 + $0x458] sm:$0xff]
    %v183 = vld [vmem:[#allocation2 + $0x460] sm:$0xff]
    %v184 = vld [vmem:[#allocation2 + $0x468] sm:$0xff]
    %v185 = vld [vmem:[#allocation2 + $0x470] sm:$0xff]
    %v186 = vld [vmem:[#allocation2 + $0x478] sm:$0xff]
    %v187 = vld [vmem:[#allocation2 + $0x480] sm:$0xff]
    %v188 = vld [vmem:[#allocation2 + $0x488] sm:$0xff]
    %v189 = vld [vmem:[#allocation2 + $0x490] sm:$0xff]
    %v190 = vld [vmem:[#allocation2 + $0x498] sm:$0xff]
    %v191 = vld [vmem:[#allocation2 + $0x4a0] sm:$0xff]
    %v192 = vld [vmem:[#allocation2 + $0x4a8] sm:$0xff]
    %v193 = vld [vmem:[#allocation2 + $0x4b0] sm:$0xff]
    %v194 = vld [vmem:[#allocation2 + $0x4b8] sm:$0xff]
    %v195 = vld [vmem:[#allocation2 + $0x4c0] sm:$0xff]
    %v196 = vld [vmem:[#allocation2 + $0x4c8] sm:$0xff]
    %v197 = vld [vmem:[#allocation2 + $0x4d0] sm:$0xff]
    %v198 = vld [vmem:[#allocation2 + $0x4d8] sm:$0xff]
    %v199 = vld [vmem:[#allocation2 + $0x4e0] sm:$0xff]
    %v200 = vld [vmem:[#allocation2 + $0x4e8] sm:$0xff]
    %v201 = vld [vmem:[#allocation2 + $0x4f0] sm:$0xff]
    %v202 = vld [vmem:[#allocation2 + $0x4f8] sm:$0xff]
    %v203 = vld [vmem:[#allocation2 + $0x500] sm:$0xff]
    %v204 = vld [vmem:[#allocation2 + $0x508] sm:$0xff]
    %v205 = vld [vmem:[#allocation2 + $0x510] sm:$0xff]
    %v206 = vld [vmem:[#allocation2 + $0x518] sm:$0xff]
    %v207 = vld [vmem:[#allocation2 + $0x520] sm:$0xff]
    %v208 = vld [vmem:[#allocation2 + $0x528] sm:$0xff]
    %v209 = vld [vmem:[#allocation2 + $0x530] sm:$0xff]
    %v210 = vld [vmem:[#allocation2 + $0x538] sm:$0xff]
    %v211 = vld [vmem:[#allocation2 + $0x540] sm:$0xff]
    %v212 = vld [vmem:[#allocation2 + $0x548] sm:$0xff]
    %v213 = vld [vmem:[#allocation2 + $0x550] sm:$0xff]
    %v214 = vld [vmem:[#allocation2 + $0x558] sm:$0xff]
    %v215 = vld [vmem:[#allocation2 + $0x560] sm:$0xff]
    %v216 = vld [vmem:[#allocation2 + $0x568] sm:$0xff]
    %v217 = vld [vmem:[#allocation2 + $0x570] sm:$0xff]
    %v218 = vld [vmem:[#allocation2 + $0x578] sm:$0xff]
    %v219 = vld [vmem:[#allocation2 + $0x580] sm:$0xff]
    %v220 = vld [vmem:[#allocation2 + $0x588] sm:$0xff]
    %v221 = vld [vmem:[#allocation2 + $0x590] sm:$0xff]
    %v222 = vld [vmem:[#allocation2 + $0x598] sm:$0xff]
    %v223 = vld [vmem:[#allocation2 + $0x5a0] sm:$0xff]
    %v224 = vld [vmem:[#allocation2 + $0x5a8] sm:$0xff]
    %v225 = vld [vmem:[#allocation2 + $0x5b0] sm:$0xff]
    %v226 = vld [vmem:[#allocation2 + $0x5b8] sm:$0xff]
    %v227 = vld [vmem:[#allocation2 + $0x5c0] sm:$0xff]
    %v228 = vld [vmem:[#allocation2 + $0x5c8] sm:$0xff]
    %v229 = vld [vmem:[#allocation2 + $0x5d0] sm:$0xff]
    %v230 = vld [vmem:[#allocation2 + $0x5d8] sm:$0xff]
    %v231 = vld [vmem:[#allocation2 + $0x5e0] sm:$0xff]
    %v232 = vld [vmem:[#allocation2 + $0x5e8] sm:$0xff]
    %v233 = vld [vmem:[#allocation2 + $0x5f0] sm:$0xff]
    %v234 = vld [vmem:[#allocation2 + $0x5f8] sm:$0xff]
    %v235 = vld [vmem:[#allocation2 + $0x600] sm:$0xff]
    %v236 = vld [vmem:[#allocation2 + $0x608] sm:$0xff]
    %v237 = vld [vmem:[#allocation2 + $0x610] sm:$0xff]
    %v238 = vld [vmem:[#allocation2 + $0x618] sm:$0xff]
    %v239 = vld [vmem:[#allocation2 + $0x620] sm:$0xff]
    %v240 = vld [vmem:[#allocation2 + $0x628] sm:$0xff]
    %v241 = vld [vmem:[#allocation2 + $0x630] sm:$0xff]
    %v242 = vld [vmem:[#allocation2 + $0x638] sm:$0xff]
    %v243 = vld [vmem:[#allocation2 + $0x640] sm:$0xff]
    %v244 = vld [vmem:[#allocation2 + $0x648] sm:$0xff]
    %v245 = vld [vmem:[#allocation2 + $0x650] sm:$0xff]
    %v246 = vld [vmem:[#allocation2 + $0x658] sm:$0xff]
    %v247 = vld [vmem:[#allocation2 + $0x660] sm:$0xff]
    %v248 = vld [vmem:[#allocation2 + $0x668] sm:$0xff]
    %v249 = vld [vmem:[#allocation2 + $0x670] sm:$0xff]
    %v250 = vld [vmem:[#allocation2 + $0x678] sm:$0xff]
    %v251 = vld [vmem:[#allocation2 + $0x680] sm:$0xff]
    %v252 = vld [vmem:[#allocation2 + $0x688] sm:$0xff]
    %v253 = vld [vmem:[#allocation2 + $0x690] sm:$0xff]
    %v254 = vld [vmem:[#allocation2 + $0x698] sm:$0xff]
    %v255 = vld [vmem:[#allocation2 + $0x6a0] sm:$0xff]
    %v256 = vld [vmem:[#allocation2 + $0x6a8] sm:$0xff]
    %v257 = vld [vmem:[#allocation2 + $0x6b0] sm:$0xff]
    %v258 = vld [vmem:[#allocation2 + $0x6b8] sm:$0xff]
    %v259 = vld [vmem:[#allocation2 + $0x6c0] sm:$0xff]
    %v260 = vld [vmem:[#allocation2 + $0x6c8] sm:$0xff]
    %v261 = vld [vmem:[#allocation2 + $0x6d0] sm:$0xff]
    %v262 = vld [vmem:[#allocation2 + $0x6d8] sm:$0xff]
    %v263 = vld [vmem:[#allocation2 + $0x6e0] sm:$0xff]
    %v264 = vld [vmem:[#allocation2 + $0x6e8] sm:$0xff]
    %v265 = vld [vmem:[#allocation2 + $0x6f0] sm:$0xff]
    %v266 = vld [vmem:[#allocation2 + $0x6f8] sm:$0xff]
    %v267 = vld [vmem:[#allocation2 + $0x700] sm:$0xff]
    %v268 = vld [vmem:[#allocation2 + $0x708] sm:$0xff]
    %v269 = vld [vmem:[#allocation2 + $0x710] sm:$0xff]
    %v270 = vld [vmem:[#allocation2 + $0x718] sm:$0xff]
    %v271 = vld [vmem:[#allocation2 + $0x720] sm:$0xff]
    %v272 = vld [vmem:[#allocation2 + $0x728] sm:$0xff]
    %v273 = vld [vmem:[#allocation2 + $0x730] sm:$0xff]
    %v274 = vld [vmem:[#allocation2 + $0x738] sm:$0xff]
    %v275 = vld [vmem:[#allocation2 + $0x740] sm:$0xff]
    %v276 = vld [vmem:[#allocation2 + $0x748] sm:$0xff]
    %v277 = vld [vmem:[#allocation2 + $0x750] sm:$0xff]
    %v278 = vld [vmem:[#allocation2 + $0x758] sm:$0xff]
    %v279 = vld [vmem:[#allocation2 + $0x760] sm:$0xff]
    %v280 = vld [vmem:[#allocation2 + $0x768] sm:$0xff]
    %v281 = vld [vmem:[#allocation2 + $0x770] sm:$0xff]
    %v282 = vld [vmem:[#allocation2 + $0x778] sm:$0xff]
    %v283 = vld [vmem:[#allocation2 + $0x780] sm:$0xff]
    %v284 = vld [vmem:[#allocation2 + $0x788] sm:$0xff]
    %v285 = vld [vmem:[#allocation2 + $0x790] sm:$0xff]
    %v286 = vld [vmem:[#allocation2 + $0x798] sm:$0xff]
    %v287 = vld [vmem:[#allocation2 + $0x7a0] sm:$0xff]
    %v288 = vld [vmem:[#allocation2 + $0x7a8] sm:$0xff]
    %v289 = vld [vmem:[#allocation2 + $0x7b0] sm:$0xff]
    %v290 = vld [vmem:[#allocation2 + $0x7b8] sm:$0xff]
    %v291 = vld [vmem:[#allocation2 + $0x7c0] sm:$0xff]
    %v292 = vld [vmem:[#allocation2 + $0x7c8] sm:$0xff]
    %v293 = vld [vmem:[#allocation2 + $0x7d0] sm:$0xff]
    %v294 = vld [vmem:[#allocation2 + $0x7d8] sm:$0xff]
    %v295 = vld [vmem:[#allocation2 + $0x7e0] sm:$0xff]
    %v296 = vld [vmem:[#allocation2 + $0x7e8] sm:$0xff]
    %v297 = vld [vmem:[#allocation2 + $0x7f0] sm:$0xff]
    %v298 = vld [vmem:[#allocation2 + $0x7f8] sm:$0xff]
    %v299 = vld [vmem:[%s2] sm:$0x3]
    %v301 = vlaneseq
    %v302 = vshrl.u32 %v301, 7
    %v303 = vsub.s32 0, %v302
    %v304 = vrot.slane %v299, %v303
    %v305 = vlaneseq
    %v306 = vshrl.u32 %v305, 7
    %v307 = vsub.s32 1, %v306
    %v308 = vrot.slane %v299, %v307
    %v313 = vcombine.high %v41, %v41
    %v315 = vunpack.c.l.s4 1983009808
    %v316 = vunpack.c.0.s8 %v315
    %v317 = vlaneseq
    %v318 = vshrl.u32 %v317, 7
    %v319 = vsub.s32 %v316, %v318
    %v320 = vrot.slane %v41, %v319
    %v322 = vunpack.c.l.s4 1983009808
    %v323 = vunpack.c.0.s8 %v322
    %v324 = vlaneseq
    %v325 = vshrl.u32 %v324, 7
    %v326 = vsub.s32 %v323, %v325
    %v327 = vrot.slane %v313, %v326
    %v328 = vcombine.high %v320, %v320
    %v329 = vcombine.high %v327, %v327
    %v330 = vcombine.high %v42, %v42
    %v332 = vunpack.c.l.s4 1983009808
    %v333 = vunpack.c.0.s8 %v332
    %v334 = vlaneseq
    %v335 = vshrl.u32 %v334, 7
    %v336 = vsub.s32 %v333, %v335
    %v337 = vrot.slane %v42, %v336
    %v339 = vunpack.c.l.s4 1983009808
    %v340 = vunpack.c.0.s8 %v339
    %v341 = vlaneseq
    %v342 = vshrl.u32 %v341, 7
    %v343 = vsub.s32 %v340, %v342
    %v344 = vrot.slane %v330, %v343
    %v345 = vcombine.high %v337, %v337
    %v346 = vcombine.high %v344, %v344
    %355 = vmatprep.subr.mxu0 %v44
    %356 = vmatpush1.msra.mxu0 %v43
    %357 = vmatprep.subr.mxu0 %v46
    %358 = vmatpush1.msra.mxu0 %v45
    %359 = vmatprep.subr.mxu0 %v48
    %360 = vmatpush1.msra.mxu0 %v47
    %361 = vmatprep.subr.mxu0 %v50
    %362 = vmatpush1.msra.mxu0 %v49
    %363 = vmatprep.subr.mxu0 %v52
    %364 = vmatpush1.msra.mxu0 %v51
    %365 = vmatprep.subr.mxu0 %v54
    %366 = vmatpush1.msra.mxu0 %v53
    %367 = vmatprep.subr.mxu0 %v56
    %368 = vmatpush1.msra.mxu0 %v55
    %369 = vmatprep.subr.mxu0 %v58
    %370 = vmatpush1.msra.mxu0 %v57
    %371 = vmatprep.subr.mxu0 %v60
    %372 = vmatpush1.msra.mxu0 %v59
    %373 = vmatprep.subr.mxu0 %v62
    %374 = vmatpush1.msra.mxu0 %v61
    %375 = vmatprep.subr.mxu0 %v64
    %376 = vmatpush1.msra.mxu0 %v63
    %377 = vmatprep.subr.mxu0 %v66
    %378 = vmatpush1.msra.mxu0 %v65
    %379 = vmatprep.subr.mxu0 %v68
    %380 = vmatpush1.msra.mxu0 %v67
    %381 = vmatprep.subr.mxu0 %v70
    %382 = vmatpush1.msra.mxu0 %v69
    %383 = vmatprep.subr.mxu0 %v72
    %384 = vmatpush1.msra.mxu0 %v71
    %385 = vmatprep.subr.mxu0 %v74
    %386 = vmatpush1.msra.mxu0 %v73
    %387 = vmatprep.subr.mxu0 %v76
    %388 = vmatpush1.msra.mxu0 %v75
    %389 = vmatprep.subr.mxu0 %v78
    %390 = vmatpush1.msra.mxu0 %v77
    %391 = vmatprep.subr.mxu0 %v80
    %392 = vmatpush1.msra.mxu0 %v79
    %393 = vmatprep.subr.mxu0 %v82
    %394 = vmatpush1.msra.mxu0 %v81
    %395 = vmatprep.subr.mxu0 %v84
    %396 = vmatpush1.msra.mxu0 %v83
    %397 = vmatprep.subr.mxu0 %v86
    %398 = vmatpush1.msra.mxu0 %v85
    %399 = vmatprep.subr.mxu0 %v88
    %400 = vmatpush1.msra.mxu0 %v87
    %401 = vmatprep.subr.mxu0 %v90
    %402 = vmatpush1.msra.mxu0 %v89
    %403 = vmatprep.subr.mxu0 %v92
    %404 = vmatpush1.msra.mxu0 %v91
    %405 = vmatprep.subr.mxu0 %v94
    %406 = vmatpush1.msra.mxu0 %v93
    %407 = vmatprep.subr.mxu0 %v96
    %408 = vmatpush1.msra.mxu0 %v95
    %409 = vmatprep.subr.mxu0 %v98
    %410 = vmatpush1.msra.mxu0 %v97
    %411 = vmatprep.subr.mxu0 %v100
    %412 = vmatpush1.msra.mxu0 %v99
    %413 = vmatprep.subr.mxu0 %v102
    %414 = vmatpush1.msra.mxu0 %v101
    %415 = vmatprep.subr.mxu0 %v104
    %416 = vmatpush1.msra.mxu0 %v103
    %417 = vmatprep.subr.mxu0 %v106
    %418 = vmatpush1.msra.mxu0 %v105
    %419 = vmatprep.mubr.f32.mxu0 %v328
    %420 = vmatmul.mubr.f32.gmra.mrb[0].mxu0 %v320
    %v421 = vpop.f32.mrb[0].mxu0
    %v422 = vadd.f32 %v304, %v421
    %v423 = vpop.f32.mrb[0].mxu0
    %v424 = vadd.f32 %v308, %v423
    %425 = vdwg.mxu0
    %426 = vmatprep.subr.mxu0 %v108
    %427 = vmatpush1.msra.mxu0 %v107
    %428 = vmatprep.subr.mxu0 %v110
    %429 = vmatpush1.msra.mxu0 %v109
    %430 = vmatprep.subr.mxu0 %v112
    %431 = vmatpush1.msra.mxu0 %v111
    %432 = vmatprep.subr.mxu0 %v114
    %433 = vmatpush1.msra.mxu0 %v113
    %434 = vmatprep.subr.mxu0 %v116
    %435 = vmatpush1.msra.mxu0 %v115
    %436 = vmatprep.subr.mxu0 %v118
    %437 = vmatpush1.msra.mxu0 %v117
    %438 = vmatprep.subr.mxu0 %v120
    %439 = vmatpush1.msra.mxu0 %v119
    %440 = vmatprep.subr.mxu0 %v122
    %441 = vmatpush1.msra.mxu0 %v121
    %442 = vmatprep.subr.mxu0 %v124
    %443 = vmatpush1.msra.mxu0 %v123
    %444 = vmatprep.subr.mxu0 %v126
    %445 = vmatpush1.msra.mxu0 %v125
    %446 = vmatprep.subr.mxu0 %v128
    %447 = vmatpush1.msra.mxu0 %v127
    %448 = vmatprep.subr.mxu0 %v130
    %449 = vmatpush1.msra.mxu0 %v129
    %450 = vmatprep.subr.mxu0 %v132
    %451 = vmatpush1.msra.mxu0 %v131
    %452 = vmatprep.subr.mxu0 %v134
    %453 = vmatpush1.msra.mxu0 %v133
    %454 = vmatprep.subr.mxu0 %v136
    %455 = vmatpush1.msra.mxu0 %v135
    %456 = vmatprep.subr.mxu0 %v138
    %457 = vmatpush1.msra.mxu0 %v137
    %458 = vmatprep.subr.mxu0 %v140
    %459 = vmatpush1.msra.mxu0 %v139
    %460 = vmatprep.subr.mxu0 %v142
    %461 = vmatpush1.msra.mxu0 %v141
    %462 = vmatprep.subr.mxu0 %v144
    %463 = vmatpush1.msra.mxu0 %v143
    %464 = vmatprep.subr.mxu0 %v146
    %465 = vmatpush1.msra.mxu0 %v145
    %466 = vmatprep.subr.mxu0 %v148
    %467 = vmatpush1.msra.mxu0 %v147
    %468 = vmatprep.subr.mxu0 %v150
    %469 = vmatpush1.msra.mxu0 %v149
    %470 = vmatprep.subr.mxu0 %v152
    %471 = vmatpush1.msra.mxu0 %v151
    %472 = vmatprep.subr.mxu0 %v154
    %473 = vmatpush1.msra.mxu0 %v153
    %474 = vmatprep.subr.mxu0 %v156
    %475 = vmatpush1.msra.mxu0 %v155
    %476 = vmatprep.subr.mxu0 %v158
    %477 = vmatpush1.msra.mxu0 %v157
    %478 = vmatprep.subr.mxu0 %v160
    %479 = vmatpush1.msra.mxu0 %v159
    %480 = vmatprep.subr.mxu0 %v162
    %481 = vmatpush1.msra.mxu0 %v161
    %482 = vmatprep.subr.mxu0 %v164
    %483 = vmatpush1.msra.mxu0 %v163
    %484 = vmatprep.subr.mxu0 %v166
    %485 = vmatpush1.msra.mxu0 %v165
    %486 = vmatprep.subr.mxu0 %v168
    %487 = vmatpush1.msra.mxu0 %v167
    %488 = vmatprep.subr.mxu0 %v170
    %489 = vmatpush1.msra.mxu0 %v169
    %490 = vmatprep.mubr.f32.mxu0 %v329
    %491 = vmatmul.mubr.f32.gmra.mrb[0].mxu0 %v327
    %v492 = vpop.f32.mrb[0].mxu0
    %v493 = vadd.f32 %v422, %v492
    %v494 = vpop.f32.mrb[0].mxu0
    %v495 = vadd.f32 %v424, %v494
    %496 = vdwg.mxu0
    %497 = vmatprep.subr.mxu0 %v172
    %498 = vmatpush1.msra.mxu0 %v171
    %499 = vmatprep.subr.mxu0 %v174
    %500 = vmatpush1.msra.mxu0 %v173
    %501 = vmatprep.subr.mxu0 %v176
    %502 = vmatpush1.msra.mxu0 %v175
    %503 = vmatprep.subr.mxu0 %v178
    %504 = vmatpush1.msra.mxu0 %v177
    %505 = vmatprep.subr.mxu0 %v180
    %506 = vmatpush1.msra.mxu0 %v179
    %507 = vmatprep.subr.mxu0 %v182
    %508 = vmatpush1.msra.mxu0 %v181
    %509 = vmatprep.subr.mxu0 %v184
    %510 = vmatpush1.msra.mxu0 %v183
    %511 = vmatprep.subr.mxu0 %v186
    %512 = vmatpush1.msra.mxu0 %v185
    %513 = vmatprep.subr.mxu0 %v188
    %514 = vmatpush1.msra.mxu0 %v187
    %515 = vmatprep.subr.mxu0 %v190
    %516 = vmatpush1.msra.mxu0 %v189
    %517 = vmatprep.subr.mxu0 %v192
    %518 = vmatpush1.msra.mxu0 %v191
    %519 = vmatprep.subr.mxu0 %v194
    %520 = vmatpush1.msra.mxu0 %v193
    %521 = vmatprep.subr.mxu0 %v196
    %522 = vmatpush1.msra.mxu0 %v195
    %523 = vmatprep.subr.mxu0 %v198
    %524 = vmatpush1.msra.mxu0 %v197
    %525 = vmatprep.subr.mxu0 %v200
    %526 = vmatpush1.msra.mxu0 %v199
    %527 = vmatprep.subr.mxu0 %v202
    %528 = vmatpush1.msra.mxu0 %v201
    %529 = vmatprep.subr.mxu0 %v204
    %530 = vmatpush1.msra.mxu0 %v203
    %531 = vmatprep.subr.mxu0 %v206
    %532 = vmatpush1.msra.mxu0 %v205
    %533 = vmatprep.subr.mxu0 %v208
    %534 = vmatpush1.msra.mxu0 %v207
    %535 = vmatprep.subr.mxu0 %v210
    %536 = vmatpush1.msra.mxu0 %v209
    %537 = vmatprep.subr.mxu0 %v212
    %538 = vmatpush1.msra.mxu0 %v211
    %539 = vmatprep.subr.mxu0 %v214
    %540 = vmatpush1.msra.mxu0 %v213
    %541 = vmatprep.subr.mxu0 %v216
    %542 = vmatpush1.msra.mxu0 %v215
    %543 = vmatprep.subr.mxu0 %v218
    %544 = vmatpush1.msra.mxu0 %v217
    %545 = vmatprep.subr.mxu0 %v220
    %546 = vmatpush1.msra.mxu0 %v219
    %547 = vmatprep.subr.mxu0 %v222
    %548 = vmatpush1.msra.mxu0 %v221
    %549 = vmatprep.subr.mxu0 %v224
    %550 = vmatpush1.msra.mxu0 %v223
    %551 = vmatprep.subr.mxu0 %v226
    %552 = vmatpush1.msra.mxu0 %v225
    %553 = vmatprep.subr.mxu0 %v228
    %554 = vmatpush1.msra.mxu0 %v227
    %555 = vmatprep.subr.mxu0 %v230
    %556 = vmatpush1.msra.mxu0 %v229
    %557 = vmatprep.subr.mxu0 %v232
    %558 = vmatpush1.msra.mxu0 %v231
    %559 = vmatprep.subr.mxu0 %v234
    %560 = vmatpush1.msra.mxu0 %v233
    %561 = vmatprep.mubr.f32.mxu0 %v345
    %562 = vmatmul.mubr.f32.gmra.mrb[0].mxu0 %v337
    %v563 = vpop.f32.mrb[0].mxu0
    %v564 = vadd.f32 %v493, %v563
    %v565 = vpop.f32.mrb[0].mxu0
    %v566 = vadd.f32 %v495, %v565
    %567 = vdwg.mxu0
    %568 = vmatprep.subr.mxu0 %v236
    %569 = vmatpush1.msra.mxu0 %v235
    %570 = vmatprep.subr.mxu0 %v238
    %571 = vmatpush1.msra.mxu0 %v237
    %572 = vmatprep.subr.mxu0 %v240
    %573 = vmatpush1.msra.mxu0 %v239
    %574 = vmatprep.subr.mxu0 %v242
    %575 = vmatpush1.msra.mxu0 %v241
    %576 = vmatprep.subr.mxu0 %v244
    %577 = vmatpush1.msra.mxu0 %v243
    %578 = vmatprep.subr.mxu0 %v246
    %579 = vmatpush1.msra.mxu0 %v245
    %580 = vmatprep.subr.mxu0 %v248
    %581 = vmatpush1.msra.mxu0 %v247
    %582 = vmatprep.subr.mxu0 %v250
    %583 = vmatpush1.msra.mxu0 %v249
    %584 = vmatprep.subr.mxu0 %v252
    %585 = vmatpush1.msra.mxu0 %v251
    %586 = vmatprep.subr.mxu0 %v254
    %587 = vmatpush1.msra.mxu0 %v253
    %588 = vmatprep.subr.mxu0 %v256
    %589 = vmatpush1.msra.mxu0 %v255
    %590 = vmatprep.subr.mxu0 %v258
    %591 = vmatpush1.msra.mxu0 %v257
    %592 = vmatprep.subr.mxu0 %v260
    %593 = vmatpush1.msra.mxu0 %v259
    %594 = vmatprep.subr.mxu0 %v262
    %595 = vmatpush1.msra.mxu0 %v261
    %596 = vmatprep.subr.mxu0 %v264
    %597 = vmatpush1.msra.mxu0 %v263
    %598 = vmatprep.subr.mxu0 %v266
    %599 = vmatpush1.msra.mxu0 %v265
    %600 = vmatprep.subr.mxu0 %v268
    %601 = vmatpush1.msra.mxu0 %v267
    %602 = vmatprep.subr.mxu0 %v270
    %603 = vmatpush1.msra.mxu0 %v269
    %604 = vmatprep.subr.mxu0 %v272
    %605 = vmatpush1.msra.mxu0 %v271
    %606 = vmatprep.subr.mxu0 %v274
    %607 = vmatpush1.msra.mxu0 %v273
    %608 = vmatprep.subr.mxu0 %v276
    %609 = vmatpush1.msra.mxu0 %v275
    %610 = vmatprep.subr.mxu0 %v278
    %611 = vmatpush1.msra.mxu0 %v277
    %612 = vmatprep.subr.mxu0 %v280
    %613 = vmatpush1.msra.mxu0 %v279
    %614 = vmatprep.subr.mxu0 %v282
    %615 = vmatpush1.msra.mxu0 %v281
    %616 = vmatprep.subr.mxu0 %v284
    %617 = vmatpush1.msra.mxu0 %v283
    %618 = vmatprep.subr.mxu0 %v286
    %619 = vmatpush1.msra.mxu0 %v285
    %620 = vmatprep.subr.mxu0 %v288
    %621 = vmatpush1.msra.mxu0 %v287
    %622 = vmatprep.subr.mxu0 %v290
    %623 = vmatpush1.msra.mxu0 %v289
    %624 = vmatprep.subr.mxu0 %v292
    %625 = vmatpush1.msra.mxu0 %v291
    %626 = vmatprep.subr.mxu0 %v294
    %627 = vmatpush1.msra.mxu0 %v293
    %628 = vmatprep.subr.mxu0 %v296
    %629 = vmatpush1.msra.mxu0 %v295
    %630 = vmatprep.subr.mxu0 %v298
    %631 = vmatpush1.msra.mxu0 %v297
    %632 = vmatprep.mubr.f32.mxu0 %v346
    %633 = vmatmul.mubr.f32.gmra.mrb[0].mxu0 %v344
    %v634 = vpop.f32.mrb[0].mxu0
    %v635 = vadd.f32 %v564, %v634
    %v636 = vpop.f32.mrb[0].mxu0
    %v637 = vadd.f32 %v566, %v636
    %638 = vdwg.mxu0
    %v639 = vmax.f32 %v635, 0.0
    %v640 = vmax.f32 %v637, 0.0
    %v641 = vld [vmem:[%s3] sm:$0xff]
    %v642 = vld [vmem:[%s3 + $0x8] sm:$0xff]
    %v643 = vld [vmem:[%s3 + $0x10] sm:$0xff]
    %v644 = vld [vmem:[%s3 + $0x18] sm:$0xff]
    %v645 = vld [vmem:[%s3 + $0x20] sm:$0xff]
    %v646 = vld [vmem:[%s3 + $0x28] sm:$0xff]
    %v647 = vld [vmem:[%s3 + $0x30] sm:$0xff]
    %v648 = vld [vmem:[%s3 + $0x38] sm:$0xff]
    %v649 = vld [vmem:[%s3 + $0x40] sm:$0xff]
    %v650 = vld [vmem:[%s3 + $0x48] sm:$0xff]
    %v651 = vld [vmem:[%s3 + $0x50] sm:$0xff]
    %v652 = vld [vmem:[%s3 + $0x58] sm:$0xff]
    %v653 = vld [vmem:[%s3 + $0x60] sm:$0xff]
    %v654 = vld [vmem:[%s3 + $0x68] sm:$0xff]
    %v655 = vld [vmem:[%s3 + $0x70] sm:$0xff]
    %v656 = vld [vmem:[%s3 + $0x78] sm:$0xff]
    %v657 = vld [vmem:[%s3 + $0x80] sm:$0xff]
    %v658 = vld [vmem:[%s3 + $0x88] sm:$0xff]
    %v659 = vld [vmem:[%s3 + $0x90] sm:$0xff]
    %v660 = vld [vmem:[%s3 + $0x98] sm:$0xff]
    %v661 = vld [vmem:[%s3 + $0xa0] sm:$0xff]
    %v662 = vld [vmem:[%s3 + $0xa8] sm:$0xff]
    %v663 = vld [vmem:[%s3 + $0xb0] sm:$0xff]
    %v664 = vld [vmem:[%s3 + $0xb8] sm:$0xff]
    %v665 = vld [vmem:[%s3 + $0xc0] sm:$0xff]
    %v666 = vld [vmem:[%s3 + $0xc8] sm:$0xff]
    %v667 = vld [vmem:[%s3 + $0xd0] sm:$0xff]
    %v668 = vld [vmem:[%s3 + $0xd8] sm:$0xff]
    %v669 = vld [vmem:[%s3 + $0xe0] sm:$0xff]
    %v670 = vld [vmem:[%s3 + $0xe8] sm:$0xff]
    %v671 = vld [vmem:[%s3 + $0xf0] sm:$0xff]
    %v672 = vld [vmem:[%s3 + $0xf8] sm:$0xff]
    %v673 = vld [vmem:[%s4] sm:$0x1]
    %v675 = vlaneseq
    %v676 = vshrl.u32 %v675, 7
    %v677 = vsub.s32 0, %v676
    %v678 = vrot.slane %v673, %v677
    %680 = vmatprep.subr.mxu0 0.0
    %681 = vmatpush1.msra.mxu0 %v641
    %682 = vmatprep.subr.mxu0 0.0
    %683 = vmatpush1.msra.mxu0 %v642
    %684 = vmatprep.subr.mxu0 0.0
    %685 = vmatpush1.msra.mxu0 %v643
    %686 = vmatprep.subr.mxu0 0.0
    %687 = vmatpush1.msra.mxu0 %v644
    %688 = vmatprep.subr.mxu0 0.0
    %689 = vmatpush1.msra.mxu0 %v645
    %690 = vmatprep.subr.mxu0 0.0
    %691 = vmatpush1.msra.mxu0 %v646
    %692 = vmatprep.subr.mxu0 0.0
    %693 = vmatpush1.msra.mxu0 %v647
    %694 = vmatprep.subr.mxu0 0.0
    %695 = vmatpush1.msra.mxu0 %v648
    %696 = vmatprep.subr.mxu0 0.0
    %697 = vmatpush1.msra.mxu0 %v649
    %698 = vmatprep.subr.mxu0 0.0
    %699 = vmatpush1.msra.mxu0 %v650
    %700 = vmatprep.subr.mxu0 0.0
    %701 = vmatpush1.msra.mxu0 %v651
    %702 = vmatprep.subr.mxu0 0.0
    %703 = vmatpush1.msra.mxu0 %v652
    %704 = vmatprep.subr.mxu0 0.0
    %705 = vmatpush1.msra.mxu0 %v653
    %706 = vmatprep.subr.mxu0 0.0
    %707 = vmatpush1.msra.mxu0 %v654
    %708 = vmatprep.subr.mxu0 0.0
    %709 = vmatpush1.msra.mxu0 %v655
    %710 = vmatprep.subr.mxu0 0.0
    %711 = vmatpush1.msra.mxu0 %v656
    %712 = vmatprep.subr.mxu0 0.0
    %713 = vmatpush1.msra.mxu0 %v657
    %714 = vmatprep.subr.mxu0 0.0
    %715 = vmatpush1.msra.mxu0 %v658
    %716 = vmatprep.subr.mxu0 0.0
    %717 = vmatpush1.msra.mxu0 %v659
    %718 = vmatprep.subr.mxu0 0.0
    %719 = vmatpush1.msra.mxu0 %v660
    %720 = vmatprep.subr.mxu0 0.0
    %721 = vmatpush1.msra.mxu0 %v661
    %722 = vmatprep.subr.mxu0 0.0
    %723 = vmatpush1.msra.mxu0 %v662
    %724 = vmatprep.subr.mxu0 0.0
    %725 = vmatpush1.msra.mxu0 %v663
    %726 = vmatprep.subr.mxu0 0.0
    %727 = vmatpush1.msra.mxu0 %v664
    %728 = vmatprep.subr.mxu0 0.0
    %729 = vmatpush1.msra.mxu0 %v665
    %730 = vmatprep.subr.mxu0 0.0
    %731 = vmatpush1.msra.mxu0 %v666
    %732 = vmatprep.subr.mxu0 0.0
    %733 = vmatpush1.msra.mxu0 %v667
    %734 = vmatprep.subr.mxu0 0.0
    %735 = vmatpush1.msra.mxu0 %v668
    %736 = vmatprep.subr.mxu0 0.0
    %737 = vmatpush1.msra.mxu0 %v669
    %738 = vmatprep.subr.mxu0 0.0
    %739 = vmatpush1.msra.mxu0 %v670
    %740 = vmatprep.subr.mxu0 0.0
    %741 = vmatpush1.msra.mxu0 %v671
    %742 = vmatprep.subr.mxu0 0.0
    %743 = vmatpush1.msra.mxu0 %v672
    %744 = vmatprep.mubr.f32.mxu0 %v640
    %745 = vmatmul.mubr.f32.gmra.mrb[0].mxu0 %v639
    %v746 = vpop.f32.mrb[0].mxu0
    %v747 = vadd.f32 %v678, %v746
    %v748 = vpop.f32.mrb[0].mxu0
    %749 = vdwg.mxu0
    %v750 = vmax.f32 %v747, 0.0
    %v751 = vld [vmem:[%s5] sm:$0xff]
    %v752 = vld [vmem:[%s5 + $0x8] sm:$0xff]
    %v753 = vld [vmem:[%s5 + $0x10] sm:$0xff]
    %v754 = vld [vmem:[%s5 + $0x18] sm:$0xff]
    %v755 = vld [vmem:[%s5 + $0x20] sm:$0xff]
    %v756 = vld [vmem:[%s5 + $0x28] sm:$0xff]
    %v757 = vld [vmem:[%s5 + $0x30] sm:$0xff]
    %v758 = vld [vmem:[%s5 + $0x38] sm:$0xff]
    %v759 = vld [vmem:[%s5 + $0x40] sm:$0xff]
    %v760 = vld [vmem:[%s5 + $0x48] sm:$0xff]
    %v761 = vld [vmem:[%s5 + $0x50] sm:$0xff]
    %v762 = vld [vmem:[%s5 + $0x58] sm:$0xff]
    %v763 = vld [vmem:[%s5 + $0x60] sm:$0xff]
    %v764 = vld [vmem:[%s5 + $0x68] sm:$0xff]
    %v765 = vld [vmem:[%s5 + $0x70] sm:$0xff]
    %v766 = vld [vmem:[%s5 + $0x78] sm:$0xff]
    %v767 = vld [vmem:[%s6] sm:$0x1]
    %v769 = vlaneseq
    %v770 = vshrl.u32 %v769, 7
    %v771 = vsub.s32 0, %v770
    %v772 = vrot.slane %v767, %v771
    %774 = vmatprep.subr.mxu0 0.0
    %775 = vmatpush1.msra.mxu0 %v751
    %776 = vmatprep.subr.mxu0 0.0
    %777 = vmatpush1.msra.mxu0 %v752
    %778 = vmatprep.subr.mxu0 0.0
    %779 = vmatpush1.msra.mxu0 %v753
    %780 = vmatprep.subr.mxu0 0.0
    %781 = vmatpush1.msra.mxu0 %v754
    %782 = vmatprep.subr.mxu0 0.0
    %783 = vmatpush1.msra.mxu0 %v755
    %784 = vmatprep.subr.mxu0 0.0
    %785 = vmatpush1.msra.mxu0 %v756
    %786 = vmatprep.subr.mxu0 0.0
    %787 = vmatpush1.msra.mxu0 %v757
    %788 = vmatprep.subr.mxu0 0.0
    %789 = vmatpush1.msra.mxu0 %v758
    %790 = vmatprep.subr.mxu0 0.0
    %791 = vmatpush1.msra.mxu0 %v759
    %792 = vmatprep.subr.mxu0 0.0
    %793 = vmatpush1.msra.mxu0 %v760
    %794 = vmatprep.subr.mxu0 0.0
    %795 = vmatpush1.msra.mxu0 %v761
    %796 = vmatprep.subr.mxu0 0.0
    %797 = vmatpush1.msra.mxu0 %v762
    %798 = vmatprep.subr.mxu0 0.0
    %799 = vmatpush1.msra.mxu0 %v763
    %800 = vmatprep.subr.mxu0 0.0
    %801 = vmatpush1.msra.mxu0 %v764
    %802 = vmatprep.subr.mxu0 0.0
    %803 = vmatpush1.msra.mxu0 %v765
    %804 = vmatprep.subr.mxu0 0.0
    %805 = vmatpush1.msra.mxu0 %v766
    %806 = vmatprep.subr.mxu0 0.0
    %807 = vmatpush1.msra.mxu0 0.0
    %808 = vmatprep.subr.mxu0 0.0
    %809 = vmatpush1.msra.mxu0 0.0
    %810 = vmatprep.subr.mxu0 0.0
    %811 = vmatpush1.msra.mxu0 0.0
    %812 = vmatprep.subr.mxu0 0.0
    %813 = vmatpush1.msra.mxu0 0.0
    %814 = vmatprep.subr.mxu0 0.0
    %815 = vmatpush1.msra.mxu0 0.0
    %816 = vmatprep.subr.mxu0 0.0
    %817 = vmatpush1.msra.mxu0 0.0
    %818 = vmatprep.subr.mxu0 0.0
    %819 = vmatpush1.msra.mxu0 0.0
    %820 = vmatprep.subr.mxu0 0.0
    %821 = vmatpush1.msra.mxu0 0.0
    %822 = vmatprep.subr.mxu0 0.0
    %823 = vmatpush1.msra.mxu0 0.0
    %824 = vmatprep.subr.mxu0 0.0
    %825 = vmatpush1.msra.mxu0 0.0
    %826 = vmatprep.subr.mxu0 0.0
    %827 = vmatpush1.msra.mxu0 0.0
    %828 = vmatprep.subr.mxu0 0.0
    %829 = vmatpush1.msra.mxu0 0.0
    %830 = vmatprep.subr.mxu0 0.0
    %831 = vmatpush1.msra.mxu0 0.0
    %832 = vmatprep.subr.mxu0 0.0
    %833 = vmatpush1.msra.mxu0 0.0
    %834 = vmatprep.subr.mxu0 0.0
    %835 = vmatpush1.msra.mxu0 0.0
    %836 = vmatprep.subr.mxu0 0.0
    %837 = vmatpush1.msra.mxu0 0.0
    %838 = vmatprep.mubr.f32.mxu0 0.0
    %839 = vmatmul.mubr.f32.gmra.mrb[0].mxu0 %v750
    %v840 = vpop.f32.mrb[0].mxu0
    %v841 = vadd.f32 %v772, %v840
    %v842 = vpop.f32.mrb[0].mxu0
    %843 = vdwg.mxu0
    %vm844 = vcmask 254976
    %845 = vst.msk [vmem:[#allocation5] sm:$0x3] %vm844, %v841
    // Predicated region
    $region34: #{small_dense_encoder_forward.1} parent=1 // pred_check
      _
    $region35: #{small_dense_encoder_forward.1} parent=1 // pred_check_branch
      %847 = sbr.rel (0) target = $region37
    $region36: #{small_dense_encoder_forward.1} parent=1 // pred_region
      %s849 = ssub.s32 32, 32
      %850 = vsyncadd [#allocation4], %s849
      %s852 = sshll.u32 [#allocation5], 4
      %s853 = int_to_ptr.vmem [resolvable:$true] %s852
      %855 = dma.vmem_to_hbm [thread:$0]  %s853, 32, %s7, [#allocation4]
    $region37: #{small_dense_encoder_forward.1} parent=1 // pred_fallthru
      _
    // Predicated region
    $region38: #{small_dense_encoder_forward.1} parent=1 // pred_check
      _
    $region39: #{small_dense_encoder_forward.1} parent=1 // pred_check_branch
      %857 = sbr.rel (0) target = $region41
    $region40: #{small_dense_encoder_forward.1} parent=1 // pred_region
      %858 = dma.done [#allocation4], 32
    $region41: #{small_dense_encoder_forward.1} parent=1 // pred_fallthru
      _
    %859 = vsyncpa [#allocation3], 1
    %860 = vsyncpa [#allocation4], 1

</llo_original>
